<compile_context>
chip_gen: v7x
topology: tpu7x:2x2x1
jax: 0.10.0
libtpu: 0.0.40
codegen_flags: <defaults>
</compile_context>

<pallas_src>
import jax
import jax.numpy as jnp
from jax.experimental import pallas as pl
from jax.experimental.pallas import tpu as pltpu


def _double_kernel(x_ref, o_ref):
    # Elementwise hot path: whole VMEM tile multiplied by 2 on the VPU.
    o_ref[...] = x_ref[...] * 2


def simple_module_forward(x):
    """Pallas implementation of SimpleModule.forward: returns x * 2."""
    orig_shape = x.shape
    dtype = x.dtype
    n = x.size
    if n == 0:
        return x

    lanes = 128
    itemsize = jnp.dtype(dtype).itemsize
    # Native sublane packing: 8 rows for 32-bit, 16 for bf16/fp16, 32 for 8-bit.
    packing = max(8, 32 // itemsize)
    tile_unit = lanes * packing

    # Target ~2 MiB per block: big enough to amortize the ~0.35 us/step grid
    # overhead (>=85% of HBM roofline), small enough that
    # 2 arrays x 2 pipeline buffers = 8 MiB fits v5e's 16 MiB scoped default
    # and v7x's 32 MiB (64 MiB physical) without special-casing.
    target_block_bytes = 2 * 1024 * 1024
    tile_rows_target = (target_block_bytes // (lanes * itemsize)) // packing * packing
    tile_rows_target = max(packing, tile_rows_target)

    if n % tile_unit == 0:
        # Fast path (the common NN-tensor case): no pad, no tail slice,
        # so HBM traffic is exactly 1 read + 1 write.
        rows = n // lanes
        x2d = x.reshape(rows, lanes)
        needs_tail = False
    else:
        # Fallback: pad the flat vector up to a whole number of native tiles.
        # TODO(synk): could instead mask the tail store in-kernel to avoid the
        # extra pad/slice HBM passes on awkward shapes.
        rows = -(-n // lanes)                       # ceil(n / 128)
        rows = -(-rows // packing) * packing        # round up to packing
        padded_n = rows * lanes
        x2d = jnp.pad(x.reshape(-1), (0, padded_n - n)).reshape(rows, lanes)
        needs_tail = True

    tile_rows = min(tile_rows_target, rows)
    grid = (pl.cdiv(rows, tile_rows),)              # ragged last block is fine

    out2d = pl.pallas_call(
        _double_kernel,
        out_shape=jax.ShapeDtypeStruct((rows, lanes), dtype),
        grid_spec=pltpu.PrefetchScalarGridSpec(
            num_scalar_prefetch=0,
            grid=grid,
            in_specs=[pl.BlockSpec((tile_rows, lanes), lambda i: (i, 0))],
            out_specs=pl.BlockSpec((tile_rows, lanes), lambda i: (i, 0)),
        ),
        # Elementwise, same shape/dtype: let XLA reuse the input buffer
        # (full benefit when the caller donates at a jit boundary).
        input_output_aliases={0: 0},
        compiler_params=pltpu.CompilerParams(
            dimension_semantics=("parallel",),      # shard grid across v7x's 2 TCs
            vmem_limit_bytes=32 * 1024 * 1024,      # headroom; safe on v5e/v6e/v7x
        ),
    )(x2d)

    if needs_tail:
        return out2d.reshape(-1)[:n].reshape(orig_shape)
    return out2d.reshape(orig_shape)


if __name__ == "__main__":
    key = jax.random.PRNGKey(0)
    # Small NCHW-style input consistent with a typical forward pass.
    x = jax.random.normal(key, (2, 4, 16, 16), dtype=jnp.float32)

    y = simple_module_forward(x)
    jax.block_until_ready(y)

    # Verify against the reference semantics (x * 2).
    assert y.shape == x.shape and y.dtype == x.dtype
    assert jnp.allclose(y, x * 2)

    print("KERNEL_OK")
</pallas_src>

<mosaic_0001>
module attributes {stable_mosaic.version = 11 : i64} {
  func.func @_double_kernel(%arg0: i32, %arg1: memref<16x128xf32, #tpu.memory_space<vmem>>, %arg2: memref<16x128xf32, #tpu.memory_space<vmem>>) attributes {dimension_semantics = [#tpu.dimension_semantics<parallel>], iteration_bounds = array<i64: 1>, scalar_prefetch = 0 : i64, scratch_operands = 0 : i64, tpu.core_type = #tpu.core_type<tc>, window_params = [{transform_indices = @transform_0, window_bounds = array<i64: 16, 128>}, {transform_indices = @transform_1, window_bounds = array<i64: 16, 128>}]} {
    %c0 = arith.constant 0 : index
    %c0_0 = arith.constant 0 : index
    %0 = vector.load %arg1[%c0, %c0_0] : memref<16x128xf32, #tpu.memory_space<vmem>>, vector<16x128xf32>
    %cst = arith.constant 2.000000e+00 : f32
    %1 = vector.broadcast %cst : f32 to vector<16x128xf32>
    %2 = arith.mulf %0, %1 : vector<16x128xf32>
    %c0_1 = arith.constant 0 : index
    %c0_2 = arith.constant 0 : index
    %3 = vector.load %arg2[%c0_1, %c0_2] : memref<16x128xf32, #tpu.memory_space<vmem>>, vector<16x128xf32>
    tpu.vector_store %arg2[%c0_1, %c0_2], %2 {strides = array<i32>} : memref<16x128xf32, #tpu.memory_space<vmem>>, vector<16x128xf32>,
    return
  }
  func.func @transform_0(%arg0: i32) -> (i32, i32) {
    %c0_i32 = arith.constant 0 : i32
    %c0_i32_0 = arith.constant 0 : i32
    return %arg0, %c0_i32 : i32, i32
  }
  func.func @transform_1(%arg0: i32) -> (i32, i32) {
    %c0_i32 = arith.constant 0 : i32
    %c0_i32_0 = arith.constant 0 : i32
    return %arg0, %c0_i32 : i32, i32
  }
}

</mosaic_0001>

<llo_original>
// kernel: tpu_custom_call.1
$region0: #{tpu_custom_call.1}
  #allocation0 [shape = 'u32[]', space=smem, size = 0x4, offset = 0x4, fixed_abs, tag = 'smem constant byte address 0x4 - core index']
  #allocation1 [shape = 'u32[144,128]{1,0:T(1,128)}', space=vmem, size = 0x12000, scoped, tag = 'internal scratch']
  %s0 = inlined_call_operand.hbm [shape: f32[16,128], index: 0, kind: input, shape index: {}, may-alias: {0,1}]
  %s1 = inlined_call_operand.hbm [shape: f32[16,128], index: 1, kind: output, shape index: {}, may-alias: {0,1}]
  %s2 = sld [smem:[#allocation0]]
  $region18: #{tpu_custom_call.1} parent=0
    _
  %s4 = ssub.s32 1, %s2
  %s5 = scalar_select 0, %s4, %s2
  $region1: #{tpu_custom_call.1} parent=0
    #allocation2 [shape = 'u8[8192]{0}', space=vmem, size = 0x2000, scoped, tag = 'input window, operand 0, single buffered']
    #allocation3 [shape = 's32[1]{0}', space=sflag, size = 0x4, scoped, tag = 'scoped memory for tpu_custom_call.1']
    #allocation4 [shape = 's32[1]{0}', space=sflag, size = 0x4, scoped, tag = 'scoped memory for tpu_custom_call.1']
    #allocation5 [shape = 'u8[8192]{0}', space=vmem, size = 0x2000, scoped, tag = 'output window, operand 0, single buffered']
    %6 = vsyncpa [#allocation3], 0
    %7 = vsyncpa [#allocation4], 0
    // Predicated region
    $region2: #{tpu_custom_call.1} parent=1 // pred_check
      _
    $region3: #{tpu_custom_call.1} parent=1 // pred_check_branch
      %9 = sbr.rel (0) target = $region5
    $region4: #{tpu_custom_call.1} parent=1 // pred_region
      %s11 = ssub.s32 256, 256
      %12 = vsyncadd [#allocation3], %s11
      %s13 = sshll.u32 [#allocation2], 4
      %s14 = int_to_ptr.vmem [resolvable:$true] %s13
      %19 = dma.hbm_to_vmem [thread:$0]  %s0, 256, %s14, [#allocation3], 128, 128, 8
    $region5: #{tpu_custom_call.1} parent=1 // pred_fallthru
      _
    // Predicated region
    $region6: #{tpu_custom_call.1} parent=1 // pred_check
      _
    $region7: #{tpu_custom_call.1} parent=1 // pred_check_branch
      %21 = sbr.rel (0) target = $region9
    $region8: #{tpu_custom_call.1} parent=1 // pred_region
      %22 = dma.done [#allocation3], 256
    $region9: #{tpu_custom_call.1} parent=1 // pred_fallthru
      _
    %v23 = vld [vmem:[#allocation2] sm:$0xff]
    %v24 = vld [vmem:[#allocation2 + $0x8] sm:$0xff]
    %v25 = vmul.f32 %v23, 2.0
    %v26 = vmul.f32 %v24, 2.0
    %27 = vst [vmem:[#allocation5] sm:$0xff] %v25
    %28 = vst [vmem:[#allocation5 + $0x8] sm:$0xff] %v26
    // Predicated region
    $region10: #{tpu_custom_call.1} parent=1 // pred_check
      _
    $region11: #{tpu_custom_call.1} parent=1 // pred_check_branch
      %30 = sbr.rel (0) target = $region13
    $region12: #{tpu_custom_call.1} parent=1 // pred_region
      %s32 = ssub.s32 256, 256
      %33 = vsyncadd [#allocation4], %s32
      %s34 = sshll.u32 [#allocation5], 4
      %s35 = int_to_ptr.vmem [resolvable:$true] %s34
      %40 = dma.vmem_to_hbm [thread:$0]  %s35, 256, %s1, [#allocation4], 128, 128, 8
    $region13: #{tpu_custom_call.1} parent=1 // pred_fallthru
      _
    // Predicated region
    $region14: #{tpu_custom_call.1} parent=1 // pred_check
      _
    $region15: #{tpu_custom_call.1} parent=1 // pred_check_branch
      %42 = sbr.rel (0) target = $region17
    $region16: #{tpu_custom_call.1} parent=1 // pred_region
      %43 = dma.done [#allocation4], 256
    $region17: #{tpu_custom_call.1} parent=1 // pred_fallthru
      _
    %44 = vsyncpa [#allocation3], 1
    %45 = vsyncpa [#allocation4], 1

</llo_original>
